<compile_context>
chip_gen: v5e
topology: v5e:2x2
jax: 0.10.0
libtpu: 0.0.40
codegen_flags: <defaults>
</compile_context>

<pallas_src>
import functools

import jax
import jax.numpy as jnp
from jax.experimental import pallas as pl
from jax.experimental.pallas import tpu as pltpu


def _round_up(x, m):
    return ((x + m - 1) // m) * m


# ----------------------------------------------------------------------------
# Kernel 1: BERT feature projection  y = tanh(x @ W + b), tiled over M = B*S
# ----------------------------------------------------------------------------

def _linear_tanh_kernel(x_ref, w_ref, b_ref, o_ref):
    y = jnp.dot(x_ref[...], w_ref[...], preferred_element_type=jnp.float32)
    o_ref[...] = jnp.tanh(y + b_ref[...])


def pallas_linear_tanh(x2d, w, b):
    # NOTE: at production sizes (D=768, H>=768) add a K-reduction grid axis and
    # 128-aligned N tiles; at these demo shapes full-K / full-N blocks fit VMEM.
    M, K = x2d.shape
    N = w.shape[1]
    tm = 128 if M >= 128 else 8
    Mp = _round_up(M, tm)
    if Mp != M:
        x2d = jnp.pad(x2d, ((0, Mp - M), (0, 0)))
    out = pl.pallas_call(
        _linear_tanh_kernel,
        out_shape=jax.ShapeDtypeStruct((Mp, N), jnp.float32),
        grid=(Mp // tm,),
        in_specs=[
            pl.BlockSpec((tm, K), lambda i: (i, 0)),
            pl.BlockSpec((K, N), lambda i: (0, 0)),
            pl.BlockSpec((1, N), lambda i: (0, 0)),
        ],
        out_specs=pl.BlockSpec((tm, N), lambda i: (i, 0)),
        compiler_params=pltpu.CompilerParams(
            dimension_semantics=("parallel",)),
    )(x2d, w, b.reshape(1, N))
    return out[:M]


# ----------------------------------------------------------------------------
# Kernel 2: semantic attentions = mean over (6 layers x heads)
#           grid = (batch [parallel], head-block [arbitrary reduction])
# ----------------------------------------------------------------------------

def _attn_mean_kernel(a_ref, o_ref, *, inv_n):
    h = pl.program_id(1)

    @pl.when(h == 0)
    def _():
        o_ref[...] = jnp.zeros_like(o_ref)

    o_ref[...] += jnp.sum(a_ref[...], axis=1)

    @pl.when(h == pl.num_programs(1) - 1)
    def _():
        o_ref[...] = o_ref[...] * inv_n


def pallas_semantic_attentions(attn, hb=8):
    B, LH, S, _ = attn.shape
    hb = min(hb, LH)
    LHp = _round_up(LH, hb)
    if LHp != LH:  # zero-padded heads contribute 0 to the sum; divide by true LH
        attn = jnp.pad(attn, ((0, 0), (0, LHp - LH), (0, 0), (0, 0)))
    return pl.pallas_call(
        functools.partial(_attn_mean_kernel, inv_n=1.0 / LH),
        out_shape=jax.ShapeDtypeStruct((B, S, S), jnp.float32),
        grid=(B, LHp // hb),
        in_specs=[pl.BlockSpec((1, hb, S, S), lambda b, h: (b, h, 0, 0))],
        out_specs=pl.BlockSpec((1, S, S), lambda b, h: (b, 0, 0)),
        compiler_params=pltpu.CompilerParams(
            dimension_semantics=("parallel", "arbitrary")),
    )(attn)


# ----------------------------------------------------------------------------
# Kernel 3: fused relational head
#   cls projection + sentence means + both projected bilinear affinities +
#   on-the-fly binary matrices + both BCE losses + v_projection + concat,
#   everything VMEM-resident, one launch, lane-dense packed outputs.
# ----------------------------------------------------------------------------

def _fused_relational_kernel(
        cls_ref, semx_ref, semy_ref, maskx_ref, masky_ref,
        pos_stack_ref, syn_stack_ref,
        posx_ref, posy_ref, synx_ref, syny_ref,
        kpsem_flat_ref, pos_w_ref, syn_w_ref,
        cls_w_ref, cls_b_ref, v_w_ref, v_b_ref,
        slab_ref, loss_ref,
        *, B, L, p_pos, p_syn, slab_width):
    f32 = jnp.float32

    # --- cls projection (MXU) ------------------------------------------------
    cls_out = jnp.dot(cls_ref[...], cls_w_ref[...],
                      preferred_element_type=f32) + cls_b_ref[...]       # [B, P]

    # --- sentence means (computed in the reference, unused downstream) -------
    inv_l = 1.0 / L
    sx = jnp.sum(semx_ref[...] * maskx_ref[...][:, :, None], axis=1) * inv_l
    sy = jnp.sum(semy_ref[...] * masky_ref[...][:, :, None], axis=1) * inv_l

    # --- projected bilinear affinities ---------------------------------------
    # TODO(synk): ProjectAffinity definition not provided; modeled as
    # K = (X Wx)(Y Wy)^T.  One MXU matmul per affinity type: batch and X/Y are
    # folded into M (rows = [X; Y]), wx/wy are fused into N (cols = [Wx | Wy]).
    def bilinear(stack, w, p):
        proj = jnp.dot(stack, w, preferred_element_type=f32)             # [2BL, 2p]
        xp = proj[:B * L, :p].reshape(B, L, p)                           # X @ Wx
        yp = proj[B * L:, p:].reshape(B, L, p)                           # Y @ Wy
        return jax.lax.dot_general(                                      # [B, L, L]
            xp, yp, (((2,), (2,)), ((0,), (0,))), preferred_element_type=f32)

    kp = bilinear(pos_stack_ref[...], pos_w_ref[...], p_pos)
    ke = bilinear(syn_stack_ref[...], syn_w_ref[...], p_syn)

    # --- binary ground-truth matrices, built on the fly (no HBM round trip) --
    pos_g = (posx_ref[...][:, :, None] == posy_ref[...][:, None, :]).astype(f32)
    syn_g = (synx_ref[...][:, :, None] == syny_ref[...][:, None, :]).astype(f32)

    # --- BCE-with-logits (mean); exp/log run on the EUP slot ------------------
    def bce_mean(x, z):
        return jnp.mean(jnp.maximum(x, 0.0) - x * z
                        + jnp.log(1.0 + jnp.exp(-jnp.abs(x))))

    was = bce_mean(kp, pos_g)
    wrs = bce_mean(ke, syn_g)

    # pack both losses into one lane-dense (1, 128) row
    lane = jax.lax.broadcasted_iota(jnp.int32, loss_ref.shape, 1)
    loss_ref[...] = (jnp.where(lane == 0, was, 0.0)
                     + jnp.where(lane == 1, wrs, 0.0))

    # --- v_projection over (KpSem + 0.5*Kp) -----------------------------------
    # KpSem is pre-flattened in the wrapper; only Kp needs the tiny in-kernel
    # [B,L,L] -> [B,L*L] relayout.
    emb_flat = kpsem_flat_ref[...] + 0.5 * kp.reshape(B, L * L)          # [B, L*L]
    emb_proj = jnp.dot(emb_flat, v_w_ref[...],
                       preferred_element_type=f32) + v_b_ref[...]        # [B, P]

    # --- lane-dense packed output slab: [emb_proj | cls | sx | sy | zero-pad] --
    pieces = [emb_proj, cls_out, sx, sy]
    used = sum(p.shape[1] for p in pieces)
    if slab_width > used:
        pieces.append(jnp.zeros((emb_proj.shape[0], slab_width - used), f32))
    slab_ref[...] = jnp.concatenate(pieces, axis=-1)


def pallas_fused_relational(cls_feat, sem_x, sem_y, mask_x, mask_y,
                            pos_stack, syn_stack,
                            pos_x_ids, pos_y_ids, syn_x_ids, syn_y_ids,
                            kpsem_flat, pos_w, syn_w,
                            cls_w, cls_b, v_w, v_b, *, B, L, H, P):
    slab_width = max(128, _round_up(2 * P + 2 * H, 128))
    kernel = functools.partial(
        _fused_relational_kernel,
        B=B, L=L, p_pos=H // 2, p_syn=H, slab_width=slab_width)
    slab, losses = pl.pallas_call(
        kernel,
        out_shape=(jax.ShapeDtypeStruct((B, slab_width), jnp.float32),
                   jax.ShapeDtypeStruct((1, 128), jnp.float32)),
    )(cls_feat, sem_x, sem_y, mask_x, mask_y,
      pos_stack, syn_stack,
      pos_x_ids.astype(jnp.int32), pos_y_ids.astype(jnp.int32),
      syn_x_ids.astype(jnp.int32), syn_y_ids.astype(jnp.int32),
      kpsem_flat, pos_w, syn_w,
      cls_w, cls_b.reshape(1, -1), v_w, v_b.reshape(1, -1))
    return slab, losses


# ----------------------------------------------------------------------------
# Network forward (glue in plain JAX, compute in 3 Pallas kernels)
# ----------------------------------------------------------------------------

def network_forward(params, inputs, cfg):
    B = inputs['batch_size']
    L = cfg['max_one_len']
    S = cfg['seq_len']
    D = cfg['bert_dim']
    H = cfg['hidden_size']
    P = cfg['predict_dim']

    # --- TextNet ----------------------------------------------------------
    # TODO(synk): BertModel (pretrained encoder) has no Pallas equivalent; its
    # outputs (hidden states + attention maps) are synthesized in-script and
    # treated as inputs to the rest of the forward pass.
    bert_hidden = inputs['bert_hidden']                 # [B, S, D]
    attn_fused = inputs['bert_attn_fused']              # [B, 6*heads, S, S]

    feat2d = pallas_linear_tanh(bert_hidden.reshape(B * S, D),
                                params['fc_w'], params['fc_b'])
    bert_feature = feat2d.reshape(B, S, H)              # [B, S, H]

    semantic_attentions = pallas_semantic_attentions(attn_fused)   # [B, S, S]

    # --- glue slices / gathers (XLA) --------------------------------------
    cls_feat = bert_feature[:, 0, :]                                 # [B, H]
    sem_x = bert_feature[:, 1:1 + L, :]                              # [B, L, H]
    sem_y = bert_feature[:, 2 + L:2 + 2 * L, :]                      # [B, L, H]
    kpsem = semantic_attentions[:, 1:1 + L, 2 + L:2 + 2 * L]         # [B, L, L]
    kpsem_flat = kpsem.reshape(B, L * L)

    pos_x_emb = jnp.take(params['pos_emb'], inputs['RelPOSXid_batch'], axis=0)
    pos_y_emb = jnp.take(params['pos_emb'], inputs['RelPOSYid_batch'], axis=0)
    syn_x_emb = jnp.take(params['syn_emb'], inputs['RelSynXid_batch'], axis=0)
    syn_y_emb = jnp.take(params['syn_emb'], inputs['RelSynYid_batch'], axis=0)
    # sem/ner embeddings are looked up in the reference but unused downstream:
    _ = jnp.take(params['sem_emb'], inputs['RelSemXid_batch'], axis=0)
    _ = jnp.take(params['ner_emb'], inputs['RelNERXid_batch'], axis=0)

    # fold batch and X/Y into M, fuse wx/wy into N (wrapper-side, free)
    pos_stack = jnp.concatenate([pos_x_emb, pos_y_emb], axis=0).reshape(2 * B * L, H)
    syn_stack = jnp.concatenate([syn_x_emb, syn_y_emb], axis=0).reshape(2 * B * L, 2 * H)
    pos_w = jnp.concatenate([params['was_wx'], params['was_wy']], axis=1)   # [H, H]
    syn_w = jnp.concatenate([params['wrs_wx'], params['wrs_wy']], axis=1)   # [2H, 2H]

    slab, losses = pallas_fused_relational(
        cls_feat, sem_x, sem_y,
        inputs['OneX_mask_batch'], inputs['OneY_mask_batch'],
        pos_stack, syn_stack,
        inputs['RelPOSXid_batch'], inputs['RelPOSYid_batch'],
        inputs['RelSynXid_batch'], inputs['RelSynYid_batch'],
        kpsem_flat, pos_w, syn_w,
        params['cls_w'], params['cls_b'], params['v_w'], params['v_b'],
        B=B, L=L, H=H, P=P)

    was_loss = cfg['lambda_first_POS'] * losses[0, 0]
    wrs_loss = cfg['lambda_second_Syn'] * losses[0, 1]
    syn_loss = was_loss + wrs_loss

    # TODO(synk): construct_aff_mat (Kronecker-structured affinity assembly),
    # data-dependent sparsity thresholding (sort + boolean indexing with
    # dynamic shapes) and the GNNLayer stack have no provided definitions /
    # no clean static-shape Pallas equivalent; skipped.

    matching_feature = slab[:, :2 * P]                               # [B, 2P]
    # (sentence_x / sentence_y live in slab[:, 2P:2P+2H]; unused, as in the ref)

    # TODO(synk): Prediction_Bert head is not defined in the reference;
    # returning the matching feature in its place.
    result = matching_feature
    return result, syn_loss


# ----------------------------------------------------------------------------
# Deterministic setup + smoke test
# ----------------------------------------------------------------------------

if __name__ == "__main__":
    key = jax.random.PRNGKey(0)

    B = 2            # batch
    L = 8            # max_one_len
    S = 2 + 2 * L    # bert sequence length (CLS + X + SEP + Y)
    D = 64           # bert hidden size (embedding_dim)
    H = 32           # args.hidden_size
    P = 16           # args.predict_dim
    heads = 4        # bert attention heads
    V_syn, V_sem, V_pos, V_ner = 16, 16, 16, 16

    cfg = dict(max_one_len=L, seq_len=S, bert_dim=D, hidden_size=H,
               predict_dim=P, lambda_first_POS=1.0, lambda_second_Syn=1.0)

    ks = jax.random.split(key, 24)
    scale = 0.02
    params = {
        'fc_w': scale * jax.random.normal(ks[0], (D, H), jnp.float32),
        'fc_b': jnp.zeros((H,), jnp.float32),
        'cls_w': scale * jax.random.normal(ks[1], (H, P), jnp.float32),
        'cls_b': jnp.zeros((P,), jnp.float32),
        'v_w': scale * jax.random.normal(ks[2], (L * L, P), jnp.float32),
        'v_b': jnp.zeros((P,), jnp.float32),
        'syn_emb': scale * jax.random.normal(ks[3], (V_syn, 2 * H), jnp.float32),
        'sem_emb': scale * jax.random.normal(ks[4], (V_sem, 2 * H), jnp.float32),
        'pos_emb': scale * jax.random.normal(ks[5], (V_pos, H), jnp.float32),
        'ner_emb': scale * jax.random.normal(ks[6], (V_ner, H), jnp.float32),
        # ProjectAffinity(H//2) on POS embeddings (dim H -> H//2)
        'was_wx': scale * jax.random.normal(ks[7], (H, H // 2), jnp.float32),
        'was_wy': scale * jax.random.normal(ks[8], (H, H // 2), jnp.float32),
        # ProjectAffinity(H) on Syn embeddings (dim 2H -> H)
        'wrs_wx': scale * jax.random.normal(ks[9], (2 * H, H), jnp.float32),
        'wrs_wy': scale * jax.random.normal(ks[10], (2 * H, H), jnp.float32),
    }

    # Synthetic deterministic "BERT" outputs (see TODO(synk) above).
    bert_hidden = jax.random.normal(ks[11], (B, S, D), jnp.float32)
    attn_logits = jax.random.normal(ks[12], (B, 6 * heads, S, S), jnp.float32)
    bert_attn_fused = jax.nn.softmax(attn_logits, axis=-1)

    inputs = {
        'batch_size': B,
        'bert_hidden': bert_hidden,
        'bert_attn_fused': bert_attn_fused,
        'OneX_mask_batch': (jax.random.uniform(ks[13], (B, L)) > 0.2
                            ).astype(jnp.float32),
        'OneY_mask_batch': (jax.random.uniform(ks[14], (B, L)) > 0.2
                            ).astype(jnp.float32),
        'RelSynXid_batch': jax.random.randint(ks[15], (B, L), 0, V_syn, jnp.int32),
        'RelSynYid_batch': jax.random.randint(ks[16], (B, L), 0, V_syn, jnp.int32),
        'RelSemXid_batch': jax.random.randint(ks[17], (B, L), 0, V_sem, jnp.int32),
        'RelSemYid_batch': jax.random.randint(ks[18], (B, L), 0, V_sem, jnp.int32),
        'RelPOSXid_batch': jax.random.randint(ks[19], (B, L), 0, V_pos, jnp.int32),
        'RelPOSYid_batch': jax.random.randint(ks[20], (B, L), 0, V_pos, jnp.int32),
        'RelNERXid_batch': jax.random.randint(ks[21], (B, L), 0, V_ner, jnp.int32),
        'RelNERYid_batch': jax.random.randint(ks[22], (B, L), 0, V_ner, jnp.int32),
    }

    result, syn_loss = network_forward(params, inputs, cfg)
    jax.block_until_ready((result, syn_loss))
    assert result.shape == (B, 2 * P)
    assert syn_loss.shape == ()
    assert bool(jnp.isfinite(syn_loss))
    print("KERNEL_OK")
</pallas_src>

<mosaic_0001>
module attributes {stable_mosaic.version = 11 : i64} {
  func.func @_linear_tanh_kernel(%arg0: i32, %arg1: memref<8x64xf32, #tpu.memory_space<vmem>>, %arg2: memref<64x32xf32, #tpu.memory_space<vmem>>, %arg3: memref<1x32xf32, #tpu.memory_space<vmem>>, %arg4: memref<8x32xf32, #tpu.memory_space<vmem>>) attributes {dimension_semantics = [#tpu.dimension_semantics<parallel>], iteration_bounds = array<i64: 5>, scalar_prefetch = 0 : i64, scratch_operands = 0 : i64, tpu.core_type = #tpu.core_type<tc>, window_params = [{transform_indices = @transform_0, window_bounds = array<i64: 8, 64>}, {pipeline_mode = #tpu.pipeline_mode<synchronous>, transform_indices = @transform_1, window_bounds = array<i64: 64, 32>}, {pipeline_mode = #tpu.pipeline_mode<synchronous>, transform_indices = @transform_2, window_bounds = array<i64: 1, 32>}, {transform_indices = @transform_3, window_bounds = array<i64: 8, 32>}]} {
    %c0 = arith.constant 0 : index
    %c0_0 = arith.constant 0 : index
    %0 = vector.load %arg1[%c0, %c0_0] : memref<8x64xf32, #tpu.memory_space<vmem>>, vector<8x64xf32>
    %c0_1 = arith.constant 0 : index
    %c0_2 = arith.constant 0 : index
    %1 = vector.load %arg2[%c0_1, %c0_2] : memref<64x32xf32, #tpu.memory_space<vmem>>, vector<64x32xf32>
    %cst = arith.constant dense<0.000000e+00> : vector<8x32xf32>
    %2 = tpu.matmul %0, %1, %cst {dimension_numbers = #tpu.dot_dimension_numbers<[1], [0], [0], [1], [0, 0, 1, 1], [], []>} : vector<8x64xf32>, vector<64x32xf32>, vector<8x32xf32> -> vector<8x32xf32>
    %c0_3 = arith.constant 0 : index
    %c0_4 = arith.constant 0 : index
    %3 = vector.load %arg3[%c0_3, %c0_4] : memref<1x32xf32, #tpu.memory_space<vmem>>, vector<1x32xf32>
    %4 = vector.broadcast %3 : vector<1x32xf32> to vector<8x32xf32>
    %5 = arith.addf %2, %4 : vector<8x32xf32>
    %6 = math.tanh %5 : vector<8x32xf32>
    %c0_5 = arith.constant 0 : index
    %c0_6 = arith.constant 0 : index
    %7 = vector.load %arg4[%c0_5, %c0_6] : memref<8x32xf32, #tpu.memory_space<vmem>>, vector<8x32xf32>
    tpu.vector_store %arg4[%c0_5, %c0_6], %6 {strides = array<i32>} : memref<8x32xf32, #tpu.memory_space<vmem>>, vector<8x32xf32>,
    return
  }
  func.func @transform_0(%arg0: i32) -> (i32, i32) {
    %c0_i32 = arith.constant 0 : i32
    %c0_i32_0 = arith.constant 0 : i32
    return %arg0, %c0_i32 : i32, i32
  }
  func.func @transform_1(%arg0: i32) -> (i32, i32) {
    %c0_i32 = arith.constant 0 : i32
    %c0_i32_0 = arith.constant 0 : i32
    %c0_i32_1 = arith.constant 0 : i32
    return %c0_i32, %c0_i32_0 : i32, i32
  }
  func.func @transform_2(%arg0: i32) -> (i32, i32) {
    %c0_i32 = arith.constant 0 : i32
    %c0_i32_0 = arith.constant 0 : i32
    %c0_i32_1 = arith.constant 0 : i32
    return %c0_i32, %c0_i32_0 : i32, i32
  }
  func.func @transform_3(%arg0: i32) -> (i32, i32) {
    %c0_i32 = arith.constant 0 : i32
    %c0_i32_0 = arith.constant 0 : i32
    return %arg0, %c0_i32 : i32, i32
  }
}

</mosaic_0001>

<llo_original>
// kernel: tpu_custom_call.1
$region0: #{tpu_custom_call.1}
  #allocation0 [shape = 'u32[]', space=smem, size = 0x4, offset = 0x4, fixed_abs, tag = 'smem constant byte address 0x4 - core index']
  #allocation1 [shape = 'u32[72,128]{1,0:T(1,128)}', space=vmem, size = 0x9000, scoped, tag = 'internal scratch']
  %s0 = inlined_call_operand.vmem [shape: f32[40,64], index: 0, kind: input, shape index: {}]
  %s1 = inlined_call_operand.vmem [shape: f32[64,32], index: 1, kind: input, shape index: {}]
  %s2 = inlined_call_operand.vmem [shape: f32[1,32], index: 2, kind: input, shape index: {}]
  %s3 = inlined_call_operand.vmem [shape: f32[40,32], index: 3, kind: output, shape index: {}]
  %s4 = sld [smem:[#allocation0]]
  $region45: #{tpu_custom_call.1} parent=0
    _
  %s6 = ssub.s32 1, %s4
  %s7 = scalar_select 0, %s6, %s4
  loop: start=0, step=1, limit=7
  $region2: #{tpu_custom_call.1} parent=0 // loop_pre_header
    _
  $region3: #{tpu_custom_call.1} parent=0 // loop_header
    %s9 = sphi 0, %s13
    %p10 = scmp.ge.s32.totalorder %s9, 7
    %s19 = sphi 0, %s21
    %s22 = sphi 0, %s19
    %s23 = sphi 0, %s22
    %s39 = sphi 0, %s23
    %s43 = sphi 0, %s43
    %s45 = sphi 0, %s43
    %s46 = sphi 0, %s45
    %s60 = sphi 0, %s46
    %s64 = sphi 0, %s64
    %s66 = sphi 0, %s64
    %s67 = sphi 0, %s66
    %s81 = sphi 0, %s67
    %s87 = sphi 0, %s89
    %s90 = sphi 0, %s87
    %s91 = sphi 0, %s90
    %s107 = sphi 0, %s91
  $region4: #{tpu_custom_call.1} parent=0 // loop_header_branch
    %12 = sbr.rel (%p10) target = $region8
  $region5: #{tpu_custom_call.1} parent=0 // loop_body
    %s14 = ssub.s32 %s9, 1
    %s15 = ssub.s32 %s9, 2
    %s16 = sadd.s32 %s9, 1
    %s17 = ssub.s32 %s9, %s16
    %p18 = scmp.eq.s32.totalorder %s17, 0
    %s20 = sadd.s32 %s19, 1
    %s21 = scalar_select %p18, %s19, %s20
    %p24 = pneg %p18
    %p25 = scmp.eq.s32.totalorder %s9, 4
    %p26 = por %p24, %p25
    %p27 = scmp.ne.s32.totalorder %s19, %s22
    %p28 = scmp.eq.s32.totalorder %s9, 0
    %p29 = por %p27, %p28
    %p30 = scmp.ne.s32.totalorder %s19, %s22
    %p31 = scmp.eq.s32.totalorder %s14, 4
    %p32 = por %p30, %p31
    %p33 = scmp.ne.s32.totalorder %s22, %s23
    %p34 = scmp.eq.s32.totalorder %s14, 0
    %p35 = por %p33, %p34
    %p36 = scmp.ne.s32.totalorder %s22, %s23
    %p37 = scmp.eq.s32.totalorder %s15, 4
    %p38 = por %p36, %p37
    %p40 = scmp.ne.s32.totalorder %s23, %s39
    %p41 = scmp.eq.s32.totalorder %s15, 0
    %p42 = por %p40, %p41
    %s44 = sadd.s32 %s43, 1
    %p47 = scmp.eq.s32.totalorder %s9, 4
    %p48 = scmp.ne.s32.totalorder %s43, %s45
    %p49 = scmp.eq.s32.totalorder %s9, 0
    %p50 = por %p48, %p49
    %p51 = scmp.ne.s32.totalorder %s43, %s45
    %p52 = scmp.eq.s32.totalorder %s14, 4
    %p53 = por %p51, %p52
    %p54 = scmp.ne.s32.totalorder %s45, %s46
    %p55 = scmp.eq.s32.totalorder %s14, 0
    %p56 = por %p54, %p55
    %p57 = scmp.ne.s32.totalorder %s45, %s46
    %p58 = scmp.eq.s32.totalorder %s15, 4
    %p59 = por %p57, %p58
    %p61 = scmp.ne.s32.totalorder %s46, %s60
    %p62 = scmp.eq.s32.totalorder %s15, 0
    %p63 = por %p61, %p62
    %s65 = sadd.s32 %s64, 1
    %p68 = scmp.eq.s32.totalorder %s9, 4
    %p69 = scmp.ne.s32.totalorder %s64, %s66
    %p70 = scmp.eq.s32.totalorder %s9, 0
    %p71 = por %p69, %p70
    %p72 = scmp.ne.s32.totalorder %s64, %s66
    %p73 = scmp.eq.s32.totalorder %s14, 4
    %p74 = por %p72, %p73
    %p75 = scmp.ne.s32.totalorder %s66, %s67
    %p76 = scmp.eq.s32.totalorder %s14, 0
    %p77 = por %p75, %p76
    %p78 = scmp.ne.s32.totalorder %s66, %s67
    %p79 = scmp.eq.s32.totalorder %s15, 4
    %p80 = por %p78, %p79
    %p82 = scmp.ne.s32.totalorder %s67, %s81
    %p83 = scmp.eq.s32.totalorder %s15, 0
    %p84 = por %p82, %p83
    %s85 = ssub.s32 %s9, %s16
    %p86 = scmp.eq.s32.totalorder %s85, 0
    %s88 = sadd.s32 %s87, 1
    %s89 = scalar_select %p86, %s87, %s88
    %p92 = pneg %p86
    %p93 = scmp.eq.s32.totalorder %s9, 4
    %p94 = por %p92, %p93
    %p95 = scmp.ne.s32.totalorder %s87, %s90
    %p96 = scmp.eq.s32.totalorder %s9, 0
    %p97 = por %p95, %p96
    %p98 = scmp.ne.s32.totalorder %s87, %s90
    %p99 = scmp.eq.s32.totalorder %s14, 4
    %p100 = por %p98, %p99
    %p101 = scmp.ne.s32.totalorder %s90, %s91
    %p102 = scmp.eq.s32.totalorder %s14, 0
    %p103 = por %p101, %p102
    %p104 = scmp.ne.s32.totalorder %s90, %s91
    %p105 = scmp.eq.s32.totalorder %s15, 4
    %p106 = por %p104, %p105
    %p108 = scmp.ne.s32.totalorder %s91, %s107
    %p109 = scmp.eq.s32.totalorder %s15, 0
    %p110 = por %p108, %p109
    %p111 = scmp.le.s32.totalorder 1, %s9
    %p112 = scmp.lt.s32.totalorder %s9, 6
    %p113 = pnand %p111, %p112
    %p114 = pneg %p113
    // Predicated region
    $region9: #{tpu_custom_call.1} parent=5 // pred_check
      _
    $region10: #{tpu_custom_call.1} parent=5 // pred_check_branch
      %116 = sbr.rel (%p113) target = $region12
    $region11: #{tpu_custom_call.1} parent=5 // pred_region
      %s117 = ssub.s32 %s9, 1
      // Predicated region
      $region13: #{tpu_custom_call.1} parent=11 // pred_check
        %p118 = pneg %p56
      $region14: #{tpu_custom_call.1} parent=11 // pred_check_branch
        %120 = sbr.rel (%p118) target = $region16
      $region15: #{tpu_custom_call.1} parent=11 // pred_region
        _
      $region16: #{tpu_custom_call.1} parent=11 // pred_fallthru
        _
      // Predicated region
      $region17: #{tpu_custom_call.1} parent=11 // pred_check
        %p121 = pneg %p77
      $region18: #{tpu_custom_call.1} parent=11 // pred_check_branch
        %123 = sbr.rel (%p121) target = $region20
      $region19: #{tpu_custom_call.1} parent=11 // pred_region
        _
      $region20: #{tpu_custom_call.1} parent=11 // pred_fallthru
        _
    $region12: #{tpu_custom_call.1} parent=5 // pred_fallthru
      _
    %p124 = scmp.lt.s32.totalorder %s9, 5
    // Predicated region
    $region21: #{tpu_custom_call.1} parent=5 // pred_check
      %p125 = pneg %p124
    $region22: #{tpu_custom_call.1} parent=5 // pred_check_branch
      %127 = sbr.rel (%p125) target = $region24
    $region23: #{tpu_custom_call.1} parent=5 // pred_region
      // Predicated region
      $region25: #{tpu_custom_call.1} parent=23 // pred_check
        %p128 = pneg %p29
      $region26: #{tpu_custom_call.1} parent=23 // pred_check_branch
        %130 = sbr.rel (%p128) target = $region28
      $region27: #{tpu_custom_call.1} parent=23 // pred_region
        %p131 = scmp.lt.s32.totalorder %s9, 4
        %s132 = scalar_select %p131, %s9, 4
        %s133 = smul.addr %s132, 8
        %s134 = scalar_lea.vmem %s0, %s133
      $region28: #{tpu_custom_call.1} parent=23 // pred_fallthru
        _
    $region24: #{tpu_custom_call.1} parent=5 // pred_fallthru
      _
    %p135 = scmp.le.s32.totalorder 1, %s9
    %p136 = scmp.lt.s32.totalorder %s9, 6
    %p137 = pnand %p135, %p136
    %p138 = pneg %p137
    // Predicated region
    $region29: #{tpu_custom_call.1} parent=5 // pred_check
      _
    $region30: #{tpu_custom_call.1} parent=5 // pred_check_branch
      %140 = sbr.rel (%p137) target = $region32
    $region31: #{tpu_custom_call.1} parent=5 // pred_region
      %s141 = ssub.s32 %s9, 1
      %p142 = scmp.lt.s32.totalorder %s14, 4
      %s143 = scalar_select %p142, %s14, 4
      %s144 = smul.addr %s143, 8
      %s145 = scalar_lea.vmem %s0, %s144
      %p146 = pneg %p35
      %p147 = pneg %p32
      %p148 = pneg %p56
      %p149 = pneg %p53
      %p150 = pneg %p77
      %p151 = pneg %p74
      %p152 = pneg %p103
      %p153 = pneg %p100
      %p154 = scmp.lt.s32.totalorder %s14, 4
      %s155 = scalar_select %p154, %s14, 4
      %s156 = smul.addr %s155, 8
      %s157 = scalar_lea.vmem %s3, %s156
      %p158 = scmp.lt.s32.totalorder %s14, 4
      %s159 = scalar_select %p158, %s14, 4
      %s160 = smul.addr %s159, 8
      %s161 = scalar_lea.vmem %s0, %s160
      %p162 = scmp.lt.s32.totalorder %s14, 4
      %s163 = scalar_select %p162, %s14, 4
      %s164 = smul.addr %s163, 8
      %s165 = scalar_lea.vmem %s3, %s164
      %v166 = vld [vmem:[%s161] sm:$0xff]
      %v167 = vld [vmem:[%s1] sm:$0xff]
      %v168 = vld [vmem:[%s1 + $0x8] sm:$0xff]
      %v169 = vld [vmem:[%s1 + $0x10] sm:$0xff]
      %v170 = vld [vmem:[%s1 + $0x18] sm:$0xff]
      %v171 = vld [vmem:[%s1 + $0x20] sm:$0xff]
      %v172 = vld [vmem:[%s1 + $0x28] sm:$0xff]
      %v173 = vld [vmem:[%s1 + $0x30] sm:$0xff]
      %v174 = vld [vmem:[%s1 + $0x38] sm:$0xff]
      %v175 = vld [vmem:[%s2] sm:$0x1]
      %v177 = vperm.slane %v175, 0
      %vm179 = vcmask 523264
      %v181 = vsel %vm179, %v166, 0
      %183 = vmatpush.msra.mxu0 0.0
      %184 = vmatpush.msra.mxu0 0.0
      %185 = vmatpush.msra.mxu0 0.0
      %186 = vmatpush.msra.mxu0 0.0
      %187 = vmatpush.msra.mxu0 0.0
      %188 = vmatpush.msra.mxu0 0.0
      %189 = vmatpush.msra.mxu0 0.0
      %190 = vmatpush.msra.mxu0 0.0
      %191 = vmatpush.msra.mxu0 %v174
      %192 = vmatpush.msra.mxu0 %v173
      %193 = vmatpush.msra.mxu0 %v172
      %194 = vmatpush.msra.mxu0 %v171
      %195 = vmatpush.msra.mxu0 %v170
      %196 = vmatpush.msra.mxu0 %v169
      %197 = vmatpush.msra.mxu0 %v168
      %198 = vmatpush.msra.mxu0 %v167
      %199 = vmatmul.f32.gmra.mxu0 %v181
      %v200 = vpop.f32.mrf.mxu0
      %v201 = vadd.f32 %v177, %v200
      %202 = vdwg.mxu0
      %v203 = vtanh.pop %v201
      %vm204 = vcmask 261120
      %205 = vst.msk [vmem:[%s165] sm:$0xff] %vm204, %v203
      %p206 = scmp.lt.s32.totalorder %s14, 4
      %s207 = scalar_select %p206, %s14, 4
      %s208 = smul.addr %s207, 8
      %s209 = scalar_lea.vmem %s3, %s208
      // Predicated region
      $region33: #{tpu_custom_call.1} parent=31 // pred_check
        %p210 = pneg %p100
      $region34: #{tpu_custom_call.1} parent=31 // pred_check_branch
        %212 = sbr.rel (%p210) target = $region36
      $region35: #{tpu_custom_call.1} parent=31 // pred_region
        _
      $region36: #{tpu_custom_call.1} parent=31 // pred_fallthru
        _
    $region32: #{tpu_custom_call.1} parent=5 // pred_fallthru
      _
    %p213 = scmp.le.s32.totalorder 2, %s9
    // Predicated region
    $region37: #{tpu_custom_call.1} parent=5 // pred_check
      %p214 = pneg %p213
    $region38: #{tpu_custom_call.1} parent=5 // pred_check_branch
      %216 = sbr.rel (%p214) target = $region40
    $region39: #{tpu_custom_call.1} parent=5 // pred_region
      %s217 = ssub.s32 %s9, 2
      // Predicated region
      $region41: #{tpu_custom_call.1} parent=39 // pred_check
        %p218 = pneg %p106
      $region42: #{tpu_custom_call.1} parent=39 // pred_check_branch
        %220 = sbr.rel (%p218) target = $region44
      $region43: #{tpu_custom_call.1} parent=39 // pred_region
        %p221 = scmp.lt.s32.totalorder %s15, 4
        %s222 = scalar_select %p221, %s15, 4
        %s223 = smul.addr %s222, 8
        %s224 = scalar_lea.vmem %s3, %s223
      $region44: #{tpu_custom_call.1} parent=39 // pred_fallthru
        _
    $region40: #{tpu_custom_call.1} parent=5 // pred_fallthru
      _
  $region6: #{tpu_custom_call.1} parent=0 // loop_footer
    %s13 = sadd.s32 1, %s9
  $region7: #{tpu_custom_call.1} parent=0 // loop_footer_branch
    %8 = sbr.rel target = $region3
  $region8: #{tpu_custom_call.1} parent=0 // loop_exit
    _

</llo_original>
